<compile_context>
chip_gen: v5e
topology: v5e:2x2
jax: 0.10.0
libtpu: 0.0.40
codegen_flags: <defaults>
</compile_context>

<pallas_src>
import math
import jax
import jax.numpy as jnp
from jax.experimental import pallas as pl
from jax.experimental.pallas import tpu as pltpu

TB_MAX = 16384  # max batch tile (lanes); safe on v5e/v6e/v7x with the 32 MiB vmem limit below


def _round_up(n, m):
    return ((n + m - 1) // m) * m


def _pick_tb(batch):
    """Trace-time batch tile: lane-aligned, capped, >=2 tiles for bigger batches (v7x)."""
    b128 = _round_up(max(int(batch), 1), 128)
    if b128 <= 256:
        return b128                                # tiny batch: single small tile
    half = _round_up(-(-b128 // 2), 128)           # prefer >=2 grid steps (megacore)
    return min(TB_MAX, half)


def _mlp_kernel(xT_ref, w1_ref, b1_ref, w2_ref, b2_ref, w3t_ref, b3_ref, oT_ref):
    # Transposed layout: batch on lanes, features on sublanes.
    xT = xT_ref[...]                               # (2, TB) f32
    w1 = w1_ref[...]                               # (16, 2)

    # ---- Layer 1 (2 -> 16): VPU broadcast-FMA (avoids a nearly-empty MXU tile).
    h1 = (w1[:, 0:1] * xT[0:1, :]
          + w1[:, 1:2] * xT[1:2, :]
          + b1_ref[...])                           # (16, TB)
    h1 = jnp.maximum(h1, 0.0)

    # ---- Layer 2 (16 -> 32): MXU with f32 accumulation; N = TB keeps lanes dense.
    h2 = jnp.dot(w2_ref[...], h1,
                 preferred_element_type=jnp.float32) + b2_ref[...]   # (32, TB)
    h2 = jnp.maximum(h2, 0.0)

    # ---- Layer 3 (32 -> 2): kept off the MXU.  Per output row: VPU multiply on
    # the full (32, TB) slab + XLU cross-sublane reduce, then bias add.
    w3t = w3t_ref[...]                             # (32, 2) == PyTorch w3.T
    b3 = b3_ref[...]                               # (2, 1)
    out0 = jnp.sum(h2 * w3t[:, 0:1], axis=0, keepdims=True) + b3[0:1, :]   # (1, TB)
    out1 = jnp.sum(h2 * w3t[:, 1:2], axis=0, keepdims=True) + b3[1:2, :]   # (1, TB)
    oT_ref[0:1, :] = out0.astype(oT_ref.dtype)     # lane-dense stores (TB wide)
    oT_ref[1:2, :] = out1.astype(oT_ref.dtype)


def generator_forward_feature_major(xT, params):
    """Fused MLP on feature-major activations: xT (2, B) f32 -> (2, B) f32.

    Preferred entry point: avoids the (B,2) <-> (2,B) whole-array HBM passes.
    """
    B = xT.shape[1]
    w1, b1 = params["w1"], params["b1"]
    w2, b2 = params["w2"], params["b2"]
    w3, b3 = params["w3"], params["b3"]
    w3t = w3.T                                     # (32, 2); tiny, folded by XLA

    TB = _pick_tb(B)
    n_tiles = -(-B // TB)
    b_pad = n_tiles * TB
    if b_pad != B:
        xT = jnp.pad(xT, ((0, 0), (0, b_pad - B)))

    param_bytes = sum(int(p.size) * p.dtype.itemsize
                      for p in (w1, b1, w2, b2, w3t, b3))
    cost = pl.CostEstimate(
        flops=2 * b_pad * (2 * 16 + 16 * 32 + 32 * 2),
        transcendentals=0,
        bytes_accessed=b_pad * (2 + 2) * 4 + param_bytes,
    )

    # Weights / biases: constant block index -> stay resident in VMEM across steps.
    const = lambda p: pl.BlockSpec(p.shape, lambda i: (0, 0))

    yT = pl.pallas_call(
        _mlp_kernel,
        out_shape=jax.ShapeDtypeStruct((2, b_pad), jnp.float32),
        grid=(n_tiles,),
        in_specs=[
            pl.BlockSpec((2, TB), lambda i: (0, i)),   # x^T, tiled over batch lanes
            const(w1), const(b1),
            const(w2), const(b2),
            const(w3t), const(b3),
        ],
        out_specs=pl.BlockSpec((2, TB), lambda i: (0, i)),
        compiler_params=pltpu.CompilerParams(
            dimension_semantics=("parallel",),         # shard batch tiles across TCs
            vmem_limit_bytes=32 * 1024 * 1024,         # explicit, safe on v5e/v6e/v7x
        ),
        cost_estimate=cost,
    )(xT, w1, b1, w2, b2, w3t, b3)

    return yT if b_pad == B else yT[:, :B]


def generator_forward(x, params):
    """PyTorch-compatible API: x (B, 2) f32 -> (B, 2) f32.

    The two transposes here are the only extra HBM passes; callers that can keep
    activations feature-major should call generator_forward_feature_major directly.
    """
    return generator_forward_feature_major(x.T, params).T


def init_params(key):
    """Deterministic init matching PyTorch nn.Linear default:
    U(-1/sqrt(fan_in), 1/sqrt(fan_in)) for weights and biases.
    Weights stored (out, in); biases stored (out, 1)."""
    dims = [(2, 16), (16, 32), (32, 2)]
    params = {}
    for idx, (fan_in, fan_out) in enumerate(dims, start=1):
        key, kw, kb = jax.random.split(key, 3)
        bound = 1.0 / math.sqrt(fan_in)
        params[f"w{idx}"] = jax.random.uniform(
            kw, (fan_out, fan_in), jnp.float32, minval=-bound, maxval=bound)
        params[f"b{idx}"] = jax.random.uniform(
            kb, (fan_out, 1), jnp.float32, minval=-bound, maxval=bound)
    return params


def _reference_forward(x, params):
    h1 = jnp.maximum(x @ params["w1"].T + params["b1"].T, 0.0)
    h2 = jnp.maximum(h1 @ params["w2"].T + params["b2"].T, 0.0)
    return h2 @ params["w3"].T + params["b3"].T


if __name__ == "__main__":
    key = jax.random.PRNGKey(0)
    key, kx1, kx2 = jax.random.split(key, 3)
    params = init_params(key)

    # Small primary test (input features fixed at 2 by the module).
    B1 = 64
    x1 = jax.random.normal(kx1, (B1, 2), jnp.float32)
    out1 = jax.block_until_ready(generator_forward(x1, params))
    ref1 = _reference_forward(x1, params)
    assert out1.shape == (B1, 2)
    assert jnp.allclose(out1, ref1, atol=1e-5, rtol=1e-5)

    # Second test exercising the multi-tile (>=2 grid steps) + ragged-pad path.
    B2 = 300
    x2 = jax.random.normal(kx2, (B2, 2), jnp.float32)
    out2 = jax.block_until_ready(generator_forward(x2, params))
    ref2 = _reference_forward(x2, params)
    assert out2.shape == (B2, 2)
    assert jnp.allclose(out2, ref2, atol=1e-5, rtol=1e-5)

    print("KERNEL_OK")
</pallas_src>

<mosaic_0001>
module attributes {stable_mosaic.version = 11 : i64} {
  func.func @_mlp_kernel(%arg0: i32, %arg1: memref<2x128xf32, #tpu.memory_space<vmem>>, %arg2: memref<16x2xf32, #tpu.memory_space<vmem>>, %arg3: memref<16x1xf32, #tpu.memory_space<vmem>>, %arg4: memref<32x16xf32, #tpu.memory_space<vmem>>, %arg5: memref<32x1xf32, #tpu.memory_space<vmem>>, %arg6: memref<32x2xf32, #tpu.memory_space<vmem>>, %arg7: memref<2x1xf32, #tpu.memory_space<vmem>>, %arg8: memref<2x128xf32, #tpu.memory_space<vmem>>) attributes {dimension_semantics = [#tpu.dimension_semantics<parallel>], iteration_bounds = array<i64: 1>, scalar_prefetch = 0 : i64, scratch_operands = 0 : i64, tpu.core_type = #tpu.core_type<tc>, window_params = [{transform_indices = @transform_0, window_bounds = array<i64: 2, 128>}, {pipeline_mode = #tpu.pipeline_mode<synchronous>, transform_indices = @transform_1, window_bounds = array<i64: 16, 2>}, {pipeline_mode = #tpu.pipeline_mode<synchronous>, transform_indices = @transform_2, window_bounds = array<i64: 16, 1>}, {pipeline_mode = #tpu.pipeline_mode<synchronous>, transform_indices = @transform_3, window_bounds = array<i64: 32, 16>}, {pipeline_mode = #tpu.pipeline_mode<synchronous>, transform_indices = @transform_4, window_bounds = array<i64: 32, 1>}, {pipeline_mode = #tpu.pipeline_mode<synchronous>, transform_indices = @transform_5, window_bounds = array<i64: 32, 2>}, {pipeline_mode = #tpu.pipeline_mode<synchronous>, transform_indices = @transform_6, window_bounds = array<i64: 2, 1>}, {transform_indices = @transform_7, window_bounds = array<i64: 2, 128>}]} {
    %c0 = arith.constant 0 : index
    %c0_0 = arith.constant 0 : index
    %0 = vector.load %arg1[%c0, %c0_0] : memref<2x128xf32, #tpu.memory_space<vmem>>, vector<2x128xf32>
    %c0_1 = arith.constant 0 : index
    %c0_2 = arith.constant 0 : index
    %1 = vector.load %arg2[%c0_1, %c0_2] : memref<16x2xf32, #tpu.memory_space<vmem>>, vector<16x2xf32>
    %2 = vector.extract_strided_slice %1 {offsets = [0, 0], sizes = [16, 1], strides = [1, 1]} : vector<16x2xf32> to vector<16x1xf32>
    %3 = vector.extract_strided_slice %0 {offsets = [0, 0], sizes = [1, 128], strides = [1, 1]} : vector<2x128xf32> to vector<1x128xf32>
    %4 = vector.broadcast %2 : vector<16x1xf32> to vector<16x128xf32>
    %5 = vector.broadcast %3 : vector<1x128xf32> to vector<16x128xf32>
    %6 = arith.mulf %4, %5 : vector<16x128xf32>
    %7 = vector.extract_strided_slice %1 {offsets = [0, 1], sizes = [16, 1], strides = [1, 1]} : vector<16x2xf32> to vector<16x1xf32>
    %8 = vector.extract_strided_slice %0 {offsets = [1, 0], sizes = [1, 128], strides = [1, 1]} : vector<2x128xf32> to vector<1x128xf32>
    %9 = vector.broadcast %7 : vector<16x1xf32> to vector<16x128xf32>
    %10 = vector.broadcast %8 : vector<1x128xf32> to vector<16x128xf32>
    %11 = arith.mulf %9, %10 : vector<16x128xf32>
    %12 = arith.addf %6, %11 : vector<16x128xf32>
    %c0_3 = arith.constant 0 : index
    %c0_4 = arith.constant 0 : index
    %13 = vector.load %arg3[%c0_3, %c0_4] : memref<16x1xf32, #tpu.memory_space<vmem>>, vector<16x1xf32>
    %14 = vector.broadcast %13 : vector<16x1xf32> to vector<16x128xf32>
    %15 = arith.addf %12, %14 : vector<16x128xf32>
    %cst = arith.constant 0.000000e+00 : f32
    %16 = vector.broadcast %cst : f32 to vector<16x128xf32>
    %17 = arith.maximumf %15, %16 : vector<16x128xf32>
    %c0_5 = arith.constant 0 : index
    %c0_6 = arith.constant 0 : index
    %18 = vector.load %arg4[%c0_5, %c0_6] : memref<32x16xf32, #tpu.memory_space<vmem>>, vector<32x16xf32>
    %cst_7 = arith.constant dense<0.000000e+00> : vector<32x128xf32>
    %19 = tpu.matmul %18, %17, %cst_7 {dimension_numbers = #tpu.dot_dimension_numbers<[1], [0], [0], [1], [0, 0, 1, 1], [], []>} : vector<32x16xf32>, vector<16x128xf32>, vector<32x128xf32> -> vector<32x128xf32>
    %c0_8 = arith.constant 0 : index
    %c0_9 = arith.constant 0 : index
    %20 = vector.load %arg5[%c0_8, %c0_9] : memref<32x1xf32, #tpu.memory_space<vmem>>, vector<32x1xf32>
    %21 = vector.broadcast %20 : vector<32x1xf32> to vector<32x128xf32>
    %22 = arith.addf %19, %21 : vector<32x128xf32>
    %cst_10 = arith.constant 0.000000e+00 : f32
    %23 = vector.broadcast %cst_10 : f32 to vector<32x128xf32>
    %24 = arith.maximumf %22, %23 : vector<32x128xf32>
    %c0_11 = arith.constant 0 : index
    %c0_12 = arith.constant 0 : index
    %25 = vector.load %arg6[%c0_11, %c0_12] : memref<32x2xf32, #tpu.memory_space<vmem>>, vector<32x2xf32>
    %c0_13 = arith.constant 0 : index
    %c0_14 = arith.constant 0 : index
    %26 = vector.load %arg7[%c0_13, %c0_14] : memref<2x1xf32, #tpu.memory_space<vmem>>, vector<2x1xf32>
    %27 = vector.extract_strided_slice %25 {offsets = [0, 0], sizes = [32, 1], strides = [1, 1]} : vector<32x2xf32> to vector<32x1xf32>
    %28 = vector.broadcast %27 : vector<32x1xf32> to vector<32x128xf32>
    %29 = arith.mulf %24, %28 : vector<32x128xf32>
    %cst_15 = arith.constant dense<0.000000e+00> : vector<128xf32>
    %30 = vector.multi_reduction <add>, %29, %cst_15 [0] : vector<32x128xf32> to vector<128xf32>
    %31 = vector.shape_cast %30 : vector<128xf32> to vector<1x128xf32>
    %32 = vector.extract_strided_slice %26 {offsets = [0, 0], sizes = [1, 1], strides = [1, 1]} : vector<2x1xf32> to vector<1x1xf32>
    %33 = vector.broadcast %32 : vector<1x1xf32> to vector<1x128xf32>
    %34 = arith.addf %31, %33 : vector<1x128xf32>
    %35 = vector.extract_strided_slice %25 {offsets = [0, 1], sizes = [32, 1], strides = [1, 1]} : vector<32x2xf32> to vector<32x1xf32>
    %36 = vector.broadcast %35 : vector<32x1xf32> to vector<32x128xf32>
    %37 = arith.mulf %24, %36 : vector<32x128xf32>
    %cst_16 = arith.constant dense<0.000000e+00> : vector<128xf32>
    %38 = vector.multi_reduction <add>, %37, %cst_16 [0] : vector<32x128xf32> to vector<128xf32>
    %39 = vector.shape_cast %38 : vector<128xf32> to vector<1x128xf32>
    %40 = vector.extract_strided_slice %26 {offsets = [1, 0], sizes = [1, 1], strides = [1, 1]} : vector<2x1xf32> to vector<1x1xf32>
    %41 = vector.broadcast %40 : vector<1x1xf32> to vector<1x128xf32>
    %42 = arith.addf %39, %41 : vector<1x128xf32>
    %c0_17 = arith.constant 0 : index
    %c0_18 = arith.constant 0 : index
    %43 = vector.load %arg8[%c0_17, %c0_18] : memref<2x128xf32, #tpu.memory_space<vmem>>, vector<1x128xf32>
    tpu.vector_store %arg8[%c0_17, %c0_18], %34 {strides = array<i32>} : memref<2x128xf32, #tpu.memory_space<vmem>>, vector<1x128xf32>,
    %c1 = arith.constant 1 : index
    %c0_19 = arith.constant 0 : index
    %44 = vector.load %arg8[%c1, %c0_19] : memref<2x128xf32, #tpu.memory_space<vmem>>, vector<1x128xf32>
    tpu.vector_store %arg8[%c1, %c0_19], %42 {strides = array<i32>} : memref<2x128xf32, #tpu.memory_space<vmem>>, vector<1x128xf32>,
    return
  }
  func.func @transform_0(%arg0: i32) -> (i32, i32) {
    %c0_i32 = arith.constant 0 : i32
    %c0_i32_0 = arith.constant 0 : i32
    return %c0_i32, %arg0 : i32, i32
  }
  func.func @transform_1(%arg0: i32) -> (i32, i32) {
    %c0_i32 = arith.constant 0 : i32
    %c0_i32_0 = arith.constant 0 : i32
    %c0_i32_1 = arith.constant 0 : i32
    return %c0_i32, %c0_i32_0 : i32, i32
  }
  func.func @transform_2(%arg0: i32) -> (i32, i32) {
    %c0_i32 = arith.constant 0 : i32
    %c0_i32_0 = arith.constant 0 : i32
    %c0_i32_1 = arith.constant 0 : i32
    return %c0_i32, %c0_i32_0 : i32, i32
  }
  func.func @transform_3(%arg0: i32) -> (i32, i32) {
    %c0_i32 = arith.constant 0 : i32
    %c0_i32_0 = arith.constant 0 : i32
    %c0_i32_1 = arith.constant 0 : i32
    return %c0_i32, %c0_i32_0 : i32, i32
  }
  func.func @transform_4(%arg0: i32) -> (i32, i32) {
    %c0_i32 = arith.constant 0 : i32
    %c0_i32_0 = arith.constant 0 : i32
    %c0_i32_1 = arith.constant 0 : i32
    return %c0_i32, %c0_i32_0 : i32, i32
  }
  func.func @transform_5(%arg0: i32) -> (i32, i32) {
    %c0_i32 = arith.constant 0 : i32
    %c0_i32_0 = arith.constant 0 : i32
    %c0_i32_1 = arith.constant 0 : i32
    return %c0_i32, %c0_i32_0 : i32, i32
  }
  func.func @transform_6(%arg0: i32) -> (i32, i32) {
    %c0_i32 = arith.constant 0 : i32
    %c0_i32_0 = arith.constant 0 : i32
    %c0_i32_1 = arith.constant 0 : i32
    return %c0_i32, %c0_i32_0 : i32, i32
  }
  func.func @transform_7(%arg0: i32) -> (i32, i32) {
    %c0_i32 = arith.constant 0 : i32
    %c0_i32_0 = arith.constant 0 : i32
    return %c0_i32, %arg0 : i32, i32
  }
}

</mosaic_0001>

<llo_original>
// kernel: tpu_custom_call.1
$region0: #{tpu_custom_call.1}
  #allocation0 [shape = 'u32[]', space=smem, size = 0x4, offset = 0x4, fixed_abs, tag = 'smem constant byte address 0x4 - core index']
  #allocation1 [shape = 'u32[72,128]{1,0:T(1,128)}', space=vmem, size = 0x9000, scoped, tag = 'internal scratch']
  %s0 = inlined_call_operand.vmem [shape: f32[2,128], index: 0, kind: input, shape index: {}]
  %s1 = inlined_call_operand.vmem [shape: f32[16,2], index: 1, kind: input, shape index: {}]
  %s2 = inlined_call_operand.vmem [shape: f32[16,1], index: 2, kind: input, shape index: {}]
  %s3 = inlined_call_operand.vmem [shape: f32[32,16], index: 3, kind: input, shape index: {}]
  %s4 = inlined_call_operand.vmem [shape: f32[32,1], index: 4, kind: input, shape index: {}]
  %s5 = inlined_call_operand.vmem [shape: f32[32,2], index: 5, kind: input, shape index: {}]
  %s6 = inlined_call_operand.vmem [shape: f32[2,1], index: 6, kind: input, shape index: {}]
  %s7 = inlined_call_operand.hbm [shape: f32[2,128], index: 7, kind: output, shape index: {}]
  %s8 = sld [smem:[#allocation0]]
  $region38: #{tpu_custom_call.1} parent=0
    _
  %s10 = ssub.s32 1, %s8
  %s11 = scalar_select 0, %s10, %s8
  $region1: #{tpu_custom_call.1} parent=0
    #allocation2 [shape = 'u8[1024]{0}', space=vmem, size = 0x400, scoped, tag = 'output window, operand 0, single buffered']
    #allocation3 [shape = 's32[1]{0}', space=sflag, size = 0x4, scoped, tag = 'scoped memory for tpu_custom_call.1']
    %12 = vsyncpa [#allocation3], 0
    // Predicated region
    $region2: #{tpu_custom_call.1} parent=1 // pred_check
      _
    $region3: #{tpu_custom_call.1} parent=1 // pred_check_branch
      %14 = sbr.rel (0) target = $region5
    $region4: #{tpu_custom_call.1} parent=1 // pred_region
      _
    $region5: #{tpu_custom_call.1} parent=1 // pred_fallthru
      _
    // Predicated region
    $region6: #{tpu_custom_call.1} parent=1 // pred_check
      _
    $region7: #{tpu_custom_call.1} parent=1 // pred_check_branch
      %16 = sbr.rel (0) target = $region9
    $region8: #{tpu_custom_call.1} parent=1 // pred_region
      _
    $region9: #{tpu_custom_call.1} parent=1 // pred_fallthru
      _
    // Predicated region
    $region10: #{tpu_custom_call.1} parent=1 // pred_check
      _
    $region11: #{tpu_custom_call.1} parent=1 // pred_check_branch
      %18 = sbr.rel (0) target = $region13
    $region12: #{tpu_custom_call.1} parent=1 // pred_region
      _
    $region13: #{tpu_custom_call.1} parent=1 // pred_fallthru
      _
    // Predicated region
    $region14: #{tpu_custom_call.1} parent=1 // pred_check
      _
    $region15: #{tpu_custom_call.1} parent=1 // pred_check_branch
      %20 = sbr.rel (0) target = $region17
    $region16: #{tpu_custom_call.1} parent=1 // pred_region
      _
    $region17: #{tpu_custom_call.1} parent=1 // pred_fallthru
      _
    // Predicated region
    $region18: #{tpu_custom_call.1} parent=1 // pred_check
      _
    $region19: #{tpu_custom_call.1} parent=1 // pred_check_branch
      %22 = sbr.rel (0) target = $region21
    $region20: #{tpu_custom_call.1} parent=1 // pred_region
      _
    $region21: #{tpu_custom_call.1} parent=1 // pred_fallthru
      _
    // Predicated region
    $region22: #{tpu_custom_call.1} parent=1 // pred_check
      _
    $region23: #{tpu_custom_call.1} parent=1 // pred_check_branch
      %24 = sbr.rel (0) target = $region25
    $region24: #{tpu_custom_call.1} parent=1 // pred_region
      _
    $region25: #{tpu_custom_call.1} parent=1 // pred_fallthru
      _
    // Predicated region
    $region26: #{tpu_custom_call.1} parent=1 // pred_check
      _
    $region27: #{tpu_custom_call.1} parent=1 // pred_check_branch
      %26 = sbr.rel (0) target = $region29
    $region28: #{tpu_custom_call.1} parent=1 // pred_region
      _
    $region29: #{tpu_custom_call.1} parent=1 // pred_fallthru
      _
    %v27 = vld [vmem:[%s0] sm:$0x3]
    %v28 = vld [vmem:[%s1] sm:$0xff]
    %v29 = vld [vmem:[%s1 + $0x8] sm:$0xff]
    %31 = vset.pattern.permute.xlu0 0
    %32 = vperm.xlu0 %31, %v28
    %v33 = vpop.permute.xlu0 %32
    %36 = vset.pattern.permute.xlu0 0
    %37 = vperm.xlu0 %36, %v29
    %v38 = vpop.permute.xlu0 %37
    %v40 = vperm.slane %v27, 0
    %v41 = vmul.f32 %v33, %v40
    %v42 = vmul.f32 %v38, %v40
    %43 = vset.pattern.permute.xlu0 1
    %44 = vperm.xlu0 %43, %v28
    %v45 = vpop.permute.xlu0 %44
    %47 = vset.pattern.permute.xlu0 1
    %48 = vperm.xlu0 %47, %v29
    %v49 = vpop.permute.xlu0 %48
    %v51 = vperm.slane %v27, 1
    %v52 = vmul.f32 %v45, %v51
    %v53 = vmul.f32 %v49, %v51
    %v54 = vadd.f32 %v41, %v52
    %v55 = vadd.f32 %v42, %v53
    %v56 = vld [vmem:[%s2] sm:$0xff]
    %v57 = vld [vmem:[%s2 + $0x8] sm:$0xff]
    %59 = vset.pattern.permute.xlu0 0
    %60 = vperm.xlu0 %59, %v56
    %v61 = vpop.permute.xlu0 %60
    %64 = vset.pattern.permute.xlu0 0
    %65 = vperm.xlu0 %64, %v57
    %v66 = vpop.permute.xlu0 %65
    %v68 = vadd.f32 %v54, %v61
    %v69 = vadd.f32 %v55, %v66
    %v70 = vmax.f32 %v68, 0.0
    %v71 = vmax.f32 %v69, 0.0
    %v72 = vld [vmem:[%s3] sm:$0xff]
    %v73 = vld [vmem:[%s3 + $0x8] sm:$0xff]
    %v74 = vld [vmem:[%s3 + $0x10] sm:$0xff]
    %v75 = vld [vmem:[%s3 + $0x18] sm:$0xff]
    %v76 = vld [vmem:[%s4] sm:$0xff]
    %v77 = vld [vmem:[%s4 + $0x8] sm:$0xff]
    %v78 = vld [vmem:[%s4 + $0x10] sm:$0xff]
    %v79 = vld [vmem:[%s4 + $0x18] sm:$0xff]
    %81 = vset.pattern.permute.xlu0 0
    %82 = vperm.xlu0 %81, %v76
    %v83 = vpop.permute.xlu0 %82
    %86 = vset.pattern.permute.xlu0 0
    %87 = vperm.xlu0 %86, %v77
    %v88 = vpop.permute.xlu0 %87
    %91 = vset.pattern.permute.xlu0 0
    %92 = vperm.xlu0 %91, %v78
    %v93 = vpop.permute.xlu0 %92
    %96 = vset.pattern.permute.xlu0 0
    %97 = vperm.xlu0 %96, %v79
    %v98 = vpop.permute.xlu0 %97
    %vm100 = vcmask 130048
    %v102 = vsel %vm100, %v72, 0
    %v105 = vsel %vm100, %v73, 0
    %v108 = vsel %vm100, %v74, 0
    %v111 = vsel %vm100, %v75, 0
    %113 = vmatpush.msra.mxu0 0.0
    %114 = vmatpush.msra.mxu0 0.0
    %115 = vmatpush.msra.mxu0 0.0
    %116 = vmatpush.msra.mxu0 0.0
    %117 = vmatpush.msra.mxu0 0.0
    %118 = vmatpush.msra.mxu0 0.0
    %119 = vmatpush.msra.mxu0 0.0
    %120 = vmatpush.msra.mxu0 0.0
    %121 = vmatpush.msra.mxu0 0.0
    %122 = vmatpush.msra.mxu0 0.0
    %123 = vmatpush.msra.mxu0 0.0
    %124 = vmatpush.msra.mxu0 0.0
    %125 = vmatpush.msra.mxu0 0.0
    %126 = vmatpush.msra.mxu0 0.0
    %127 = vmatpush.msra.mxu0 %v71
    %128 = vmatpush.msra.mxu0 %v70
    %129 = vmatmul.f32.gmra.mxu0 %v102
    %v130 = vpop.f32.mrf.mxu0
    %v131 = vadd.f32 %v83, %v130
    %132 = vmatmul.f32.gmra.mxu0 %v105
    %v133 = vpop.f32.mrf.mxu0
    %v134 = vadd.f32 %v88, %v133
    %135 = vmatmul.f32.gmra.mxu0 %v108
    %v136 = vpop.f32.mrf.mxu0
    %v137 = vadd.f32 %v93, %v136
    %138 = vmatmul.f32.gmra.mxu0 %v111
    %v139 = vpop.f32.mrf.mxu0
    %v140 = vadd.f32 %v98, %v139
    %141 = vdwg.mxu0
    %v142 = vmax.f32 %v131, 0.0
    %v143 = vmax.f32 %v134, 0.0
    %v144 = vmax.f32 %v137, 0.0
    %v145 = vmax.f32 %v140, 0.0
    %v146 = vld [vmem:[%s5] sm:$0xff]
    %v147 = vld [vmem:[%s5 + $0x8] sm:$0xff]
    %v148 = vld [vmem:[%s5 + $0x10] sm:$0xff]
    %v149 = vld [vmem:[%s5 + $0x18] sm:$0xff]
    %v150 = vld [vmem:[%s6] sm:$0x3]
    %152 = vset.pattern.permute.xlu0 0
    %153 = vperm.xlu0 %152, %v146
    %v154 = vpop.permute.xlu0 %153
    %157 = vset.pattern.permute.xlu0 0
    %158 = vperm.xlu0 %157, %v147
    %v159 = vpop.permute.xlu0 %158
    %162 = vset.pattern.permute.xlu0 0
    %163 = vperm.xlu0 %162, %v148
    %v164 = vpop.permute.xlu0 %163
    %167 = vset.pattern.permute.xlu0 0
    %168 = vperm.xlu0 %167, %v149
    %v169 = vpop.permute.xlu0 %168
    %v171 = vmul.f32 %v142, %v154
    %v172 = vmul.f32 %v143, %v159
    %v173 = vmul.f32 %v144, %v164
    %v174 = vmul.f32 %v145, %v169
    %v175 = vadd.f32 %v171, %v172
    %v176 = vadd.f32 %v175, %v173
    %v177 = vadd.f32 %v176, %v174
    %v178 = vrot.slane %v177, 4
    %v179 = vadd.f32 %v177, %v178
    %v180 = vrot.slane %v179, 2
    %v181 = vadd.f32 %v179, %v180
    %v182 = vrot.slane %v181, 1
    %v183 = vadd.f32 %v181, %v182
    %185 = vset.pattern.permute.xlu0 0
    %186 = vperm.xlu0 %185, %v150
    %v187 = vpop.permute.xlu0 %186
    %v189 = vadd.f32 %v183, %v187
    %190 = vset.pattern.permute.xlu0 1
    %191 = vperm.xlu0 %190, %v146
    %v192 = vpop.permute.xlu0 %191
    %194 = vset.pattern.permute.xlu0 1
    %195 = vperm.xlu0 %194, %v147
    %v196 = vpop.permute.xlu0 %195
    %198 = vset.pattern.permute.xlu0 1
    %199 = vperm.xlu0 %198, %v148
    %v200 = vpop.permute.xlu0 %199
    %202 = vset.pattern.permute.xlu0 1
    %203 = vperm.xlu0 %202, %v149
    %v204 = vpop.permute.xlu0 %203
    %v206 = vmul.f32 %v142, %v192
    %v207 = vmul.f32 %v143, %v196
    %v208 = vmul.f32 %v144, %v200
    %v209 = vmul.f32 %v145, %v204
    %v210 = vadd.f32 %v206, %v207
    %v211 = vadd.f32 %v210, %v208
    %v212 = vadd.f32 %v211, %v209
    %v213 = vrot.slane %v212, 4
    %v214 = vadd.f32 %v212, %v213
    %v215 = vrot.slane %v214, 2
    %v216 = vadd.f32 %v214, %v215
    %v217 = vrot.slane %v216, 1
    %v218 = vadd.f32 %v216, %v217
    %v219 = vadd.f32 %v218, %v187
    %220 = vst [vmem:[#allocation2] sm:$0x1] %v189
    %221 = vst [vmem:[#allocation2] sm:$0x2] %v219
    // Predicated region
    $region30: #{tpu_custom_call.1} parent=1 // pred_check
      _
    $region31: #{tpu_custom_call.1} parent=1 // pred_check_branch
      %223 = sbr.rel (0) target = $region33
    $region32: #{tpu_custom_call.1} parent=1 // pred_region
      %225 = vsyncadd [#allocation3], 0
      %s227 = sshll.u32 [#allocation2], 4
      %s228 = int_to_ptr.vmem [resolvable:$true] %s227
      %s229 = sshll.u32 %s7, 4
      %s230 = int_to_ptr.hbm [resolvable:$true] %s229
      %232 = dma.vmem_to_hbm [thread:$0]  %s228, 32, %s230, [#allocation3]
    $region33: #{tpu_custom_call.1} parent=1 // pred_fallthru
      _
    // Predicated region
    $region34: #{tpu_custom_call.1} parent=1 // pred_check
      _
    $region35: #{tpu_custom_call.1} parent=1 // pred_check_branch
      %234 = sbr.rel (0) target = $region37
    $region36: #{tpu_custom_call.1} parent=1 // pred_region
      %236 = dma.done [#allocation3], 32
    $region37: #{tpu_custom_call.1} parent=1 // pred_fallthru
      _
    %237 = vsyncpa [#allocation3], 1

</llo_original>
